<compile_context>
chip_gen: v5e
topology: v5e:2x2
jax: 0.10.0
libtpu: 0.0.40
codegen_flags: <defaults>
</compile_context>

<pallas_src>
import functools
import math

import jax
import jax.numpy as jnp
from jax.experimental import pallas as pl
from jax.experimental.pallas import tpu as pltpu


_VMEM_BUDGET = 40 << 20   # tile-selection budget; leaves headroom under 64 MiB


def _round_up(v, m):
    return ((v + m - 1) // m) * m


def _workset_bytes(tb, tc, d, x_isz, w_isz):
    """Estimated live VMEM bytes for one grid step (pipeline buffers already 2x)."""
    return (2 * tb * d * x_isz        # normalized-x tile, double-buffered
            + 2 * tc * d * w_isz      # weight tile, double-buffered
            + tc * d * x_isz          # cached normalized-weight scratch
            + 2 * tb * 4              # label tile, double-buffered
            + 2 * tb * tc * 4         # output tile, double-buffered
            + 6 * tb * tc * 4)        # live f32 epilogue temporaries


def arc_margin_kernel(xn_ref, w_ref, label_ref, out_ref, wn_scratch, *,
                      scale, s_cos_m, s_sin_m, th, s_mm, easy_margin, ls_eps,
                      out_features, block_c, normalize_weight, cache_weight,
                      mxu_dtype):
    # ---- normalized weight tile (each class tile is visited once) ---------
    def _normalized_w():
        w = w_ref[...].astype(jnp.float32)
        # F.normalize(eps=1e-12): 1/max(||v||,1e-12) == rsqrt(max(sum v^2,1e-24))
        inv_w = jax.lax.rsqrt(
            jnp.maximum(jnp.sum(w * w, axis=1, keepdims=True), 1e-24))
        return (w * inv_w).astype(mxu_dtype)

    if not normalize_weight:
        # Weights were pre-normalized (and cast) in the wrapper / stored bf16.
        w_n = w_ref[...]
    elif cache_weight:
        # Batch is tiled: normalize once per class tile, reuse across the
        # inner batch sweep (batch axis is "arbitrary" -> megacore-safe init).
        @pl.when(pl.program_id(1) == 0)
        def _():
            wn_scratch[...] = _normalized_w()
        w_n = wn_scratch[...]
    else:
        # Single batch tile: each weight tile is seen once, normalize inline.
        w_n = _normalized_w()

    # ---- cosine: x is pre-normalized, so the matmul output IS the cosine --
    # Contract dim 1 of BOTH operands: no w.T materialization, D on lanes.
    cosine = jax.lax.dot_general(
        xn_ref[...], w_n, dimension_numbers=(((1,), (1,)), ((), ())),
        preferred_element_type=jnp.float32)           # (TB, TC) f32

    # ---- ArcFace margin (scale folded into the constants) -----------------
    sine = jnp.sqrt(jnp.maximum(1.0 - cosine * cosine, 0.0))
    cos_s = cosine * scale
    phi_s = cosine * s_cos_m - sine * s_sin_m
    if easy_margin:
        phi_s = jnp.where(cosine > 0.0, phi_s, cos_s)
    else:
        phi_s = jnp.where(cosine > th, phi_s, cos_s - s_mm)

    # ---- one-hot select: local iota vs (label - class-tile offset) --------
    col0 = pl.program_id(0) * block_c
    hit = (jax.lax.broadcasted_iota(jnp.int32, cosine.shape, 1)
           == (label_ref[...] - col0))
    if ls_eps > 0.0:
        one_hot = (1.0 - ls_eps) * hit.astype(jnp.float32) + (ls_eps / out_features)
        out = cos_s + one_hot * (phi_s - cos_s)
    else:
        out = jnp.where(hit, phi_s, cos_s)

    out_ref[...] = out.astype(out_ref.dtype)


def arc_margin_product(x, weight, label, *,
                       scale=30.0, margin=0.5, easy_margin=False, ls_eps=0.0,
                       block_b=2048, block_c=512, mxu_dtype=jnp.bfloat16,
                       prenormalize_weight=False):
    """x: (B, in_features) f32; weight: (out_features, in_features) f32;
       label: (B,) int.  Returns (B, out_features) f32."""
    B, D = x.shape
    C, D2 = weight.shape
    assert D == D2

    x_isz = jnp.dtype(mxu_dtype).itemsize
    row_mult = 8 if x_isz >= 4 else 16          # dense vreg packing for bf16
    w_isz = x_isz if prenormalize_weight else jnp.dtype(weight.dtype).itemsize

    TC = min(_round_up(block_c, 128), _round_up(C, 128))

    # Batch-resident tiling: make TB as large as allowed (ideally the whole
    # padded batch) so the weight matrix is streamed from HBM exactly once.
    TB = min(_round_up(B, row_mult), _round_up(block_b, row_mult))
    while TB > row_mult and _workset_bytes(TB, TC, D, x_isz, w_isz) > _VMEM_BUDGET:
        TB = max(row_mult, _round_up(TB // 2, row_mult))

    Bp = _round_up(B, TB)
    Cp = _round_up(C, TC)
    n_b = Bp // TB
    n_c = Cp // TC

    # L2-normalize x once in the wrapper (O(B*D) << O(C*D)); the kernel's
    # matmul output is then directly the cosine.
    x32 = x.astype(jnp.float32)
    xn = x32 * jax.lax.rsqrt(
        jnp.maximum(jnp.sum(x32 * x32, axis=1, keepdims=True), 1e-24))
    xn = xn.astype(mxu_dtype)

    if prenormalize_weight:
        # bf16 weight storage (v5e/v6e HBM saver; amortize over repeated calls).
        w32 = weight.astype(jnp.float32)
        w_in = (w32 * jax.lax.rsqrt(
            jnp.maximum(jnp.sum(w32 * w32, axis=1, keepdims=True), 1e-24))
                ).astype(mxu_dtype)
    else:
        w_in = weight

    if Bp != B:
        xn = jnp.pad(xn, ((0, Bp - B), (0, 0)))
        label = jnp.pad(label, ((0, Bp - B),))
    if Cp != C:
        w_in = jnp.pad(w_in, ((0, Cp - C), (0, 0)))
    label2d = label.reshape(Bp, 1).astype(jnp.int32)

    cos_m = math.cos(margin)
    sin_m = math.sin(margin)
    th = math.cos(math.pi - margin)
    mm = math.sin(math.pi - margin) * margin

    normalize_weight = not prenormalize_weight
    cache_weight = normalize_weight and (n_b > 1)

    kernel = functools.partial(
        arc_margin_kernel,
        scale=scale, s_cos_m=scale * cos_m, s_sin_m=scale * sin_m, th=th,
        s_mm=scale * mm, easy_margin=easy_margin, ls_eps=ls_eps,
        out_features=C, block_c=TC, normalize_weight=normalize_weight,
        cache_weight=cache_weight, mxu_dtype=mxu_dtype)

    ws = _workset_bytes(TB, TC, D, x_isz, w_isz)
    vmem_limit = int(min(48 << 20, max(32 << 20, ws + ws // 2)))

    out = pl.pallas_call(
        kernel,
        out_shape=jax.ShapeDtypeStruct((Bp, Cp), jnp.float32),
        # Class tiles OUTER, batch tiles INNER: each weight tile is DMA'd
        # (and normalized) once; the already-normalized, smaller x tiles are
        # the re-streamed operand when the batch does not fit one tile.
        grid=(n_c, n_b),
        in_specs=[
            pl.BlockSpec((TB, D), lambda c, b: (b, 0)),   # normalized x tile
            pl.BlockSpec((TC, D), lambda c, b: (c, 0)),   # weight tile
            pl.BlockSpec((TB, 1), lambda c, b: (b, 0)),   # labels
        ],
        out_specs=pl.BlockSpec((TB, TC), lambda c, b: (b, c)),
        scratch_shapes=[pltpu.VMEM((TC, D), mxu_dtype)],
        compiler_params=pltpu.CompilerParams(
            # class axis "parallel" -> v7x's two TensorCores split class
            # tiles; batch axis "arbitrary" so the @pl.when(b == 0) scratch
            # init is megacore-safe.
            dimension_semantics=("parallel", "arbitrary"),
            vmem_limit_bytes=vmem_limit),
    )(xn, w_in, label2d)

    return out[:B, :C]


if __name__ == "__main__":
    batch, in_features, out_features = 8, 32, 300

    key = jax.random.PRNGKey(0)
    kx, kw, kl = jax.random.split(key, 3)

    x = jax.random.normal(kx, (batch, in_features), dtype=jnp.float32)
    # Deterministic xavier_uniform_-style init: bound = sqrt(6/(fan_in+fan_out))
    bound = math.sqrt(6.0 / (in_features + out_features))
    weight = jax.random.uniform(kw, (out_features, in_features),
                                dtype=jnp.float32, minval=-bound, maxval=bound)
    label = jax.random.randint(kl, (batch,), 0, out_features, dtype=jnp.int32)

    # Pure-JAX f32 reference (same math as the PyTorch module).
    def reference(x, weight, label, scale=30.0, margin=0.5,
                  easy_margin=False, ls_eps=0.0):
        xn = x / jnp.maximum(jnp.linalg.norm(x, axis=1, keepdims=True), 1e-12)
        wn = weight / jnp.maximum(
            jnp.linalg.norm(weight, axis=1, keepdims=True), 1e-12)
        cosine = jnp.dot(xn, wn.T, precision=jax.lax.Precision.HIGHEST)
        sine = jnp.sqrt(jnp.clip(1.0 - cosine ** 2, 0.0, 1.0))
        cos_m, sin_m = math.cos(margin), math.sin(margin)
        th = math.cos(math.pi - margin)
        mm = math.sin(math.pi - margin) * margin
        phi = cosine * cos_m - sine * sin_m
        if easy_margin:
            phi = jnp.where(cosine > 0, phi, cosine)
        else:
            phi = jnp.where(cosine > th, phi, cosine - mm)
        C = weight.shape[0]
        one_hot = jax.nn.one_hot(label, C, dtype=jnp.float32)
        if ls_eps > 0:
            one_hot = (1.0 - ls_eps) * one_hot + ls_eps / C
        return (one_hot * phi + (1.0 - one_hot) * cosine) * scale

    ref = reference(x, weight, label)

    # 1) Exact path (f32 MXU inputs, batch-resident single tile) - tight tol.
    out_f32 = arc_margin_product(x, weight, label, mxu_dtype=jnp.float32)
    jax.block_until_ready(out_f32)
    assert out_f32.shape == (batch, out_features)
    assert jnp.allclose(out_f32, ref, atol=1e-3, rtol=1e-3), \
        float(jnp.max(jnp.abs(out_f32 - ref)))

    # 2) Performance path (bf16 MXU inputs, f32 accumulation) - looser tol.
    out_bf16 = arc_margin_product(x, weight, label, mxu_dtype=jnp.bfloat16)
    jax.block_until_ready(out_bf16)
    assert out_bf16.shape == (batch, out_features)
    assert jnp.allclose(out_bf16, ref, atol=0.35, rtol=2e-2), \
        float(jnp.max(jnp.abs(out_bf16 - ref)))

    # 3) Pre-normalized bf16 weight storage (v5e/v6e HBM-saving option).
    out_pre = arc_margin_product(x, weight, label, mxu_dtype=jnp.bfloat16,
                                 prenormalize_weight=True)
    jax.block_until_ready(out_pre)
    assert jnp.allclose(out_pre, ref, atol=0.35, rtol=2e-2), \
        float(jnp.max(jnp.abs(out_pre - ref)))

    # 4) Forced batch tiling: exercises the class-outer / batch-inner grid,
    #    the @pl.when-cached normalized-weight scratch, and the ls_eps path.
    batch4 = 32
    kx4, kl4 = jax.random.split(jax.random.PRNGKey(1))
    x4 = jax.random.normal(kx4, (batch4, in_features), dtype=jnp.float32)
    label4 = jax.random.randint(kl4, (batch4,), 0, out_features,
                                dtype=jnp.int32)
    ref4 = reference(x4, weight, label4, ls_eps=0.1)
    out4 = arc_margin_product(x4, weight, label4, ls_eps=0.1,
                              block_b=8, mxu_dtype=jnp.float32)
    jax.block_until_ready(out4)
    assert out4.shape == (batch4, out_features)
    assert jnp.allclose(out4, ref4, atol=1e-3, rtol=1e-3), \
        float(jnp.max(jnp.abs(out4 - ref4)))

    print("KERNEL_OK")
</pallas_src>

<mosaic_0001>
module attributes {stable_mosaic.version = 11 : i64} {
  func.func @arc_margin_kernel(%arg0: i32, %arg1: i32, %arg2: memref<8x32xf32, #tpu.memory_space<vmem>>, %arg3: memref<384x32xf32, #tpu.memory_space<vmem>>, %arg4: memref<8x1xi32, #tpu.memory_space<vmem>>, %arg5: memref<8x384xf32, #tpu.memory_space<vmem>>, %arg6: memref<384x32xf32, #tpu.memory_space<vmem>>) attributes {dimension_semantics = [#tpu.dimension_semantics<parallel>, #tpu.dimension_semantics<arbitrary>], iteration_bounds = array<i64: 1, 1>, scalar_prefetch = 0 : i64, scratch_operands = 1 : i64, tpu.core_type = #tpu.core_type<tc>, window_params = [{transform_indices = @transform_0, window_bounds = array<i64: 8, 32>}, {transform_indices = @transform_1, window_bounds = array<i64: 384, 32>}, {transform_indices = @transform_2, window_bounds = array<i64: 8, 1>}, {transform_indices = @transform_3, window_bounds = array<i64: 8, 384>}]} {
    %c0 = arith.constant 0 : index
    %c0_0 = arith.constant 0 : index
    %0 = vector.load %arg3[%c0, %c0_0] : memref<384x32xf32, #tpu.memory_space<vmem>>, vector<384x32xf32>
    %1 = arith.mulf %0, %0 : vector<384x32xf32>
    %cst = arith.constant dense<0.000000e+00> : vector<384xf32>
    %2 = vector.multi_reduction <add>, %1, %cst [1] : vector<384x32xf32> to vector<384xf32>
    %3 = vector.shape_cast %2 : vector<384xf32> to vector<384x1xf32>
    %cst_1 = arith.constant 1.000000e-24 : f32
    %4 = vector.broadcast %cst_1 : f32 to vector<384x1xf32>
    %5 = arith.maximumf %3, %4 : vector<384x1xf32>
    %6 = math.rsqrt %5 : vector<384x1xf32>
    %7 = vector.broadcast %6 : vector<384x1xf32> to vector<384x32xf32>
    %8 = arith.mulf %0, %7 : vector<384x32xf32>
    %c0_2 = arith.constant 0 : index
    %c0_3 = arith.constant 0 : index
    %9 = vector.load %arg2[%c0_2, %c0_3] : memref<8x32xf32, #tpu.memory_space<vmem>>, vector<8x32xf32>
    %cst_4 = arith.constant dense<0.000000e+00> : vector<8x384xf32>
    %10 = tpu.matmul %9, %8, %cst_4 {dimension_numbers = #tpu.dot_dimension_numbers<[1], [1], [0], [0], [0, 0, 1, 0], [], []>} : vector<8x32xf32>, vector<384x32xf32>, vector<8x384xf32> -> vector<8x384xf32>
    %11 = arith.mulf %10, %10 : vector<8x384xf32>
    %cst_5 = arith.constant 1.000000e+00 : f32
    %12 = vector.broadcast %cst_5 : f32 to vector<8x384xf32>
    %13 = arith.subf %12, %11 : vector<8x384xf32>
    %cst_6 = arith.constant 0.000000e+00 : f32
    %14 = vector.broadcast %cst_6 : f32 to vector<8x384xf32>
    %15 = arith.maximumf %13, %14 : vector<8x384xf32>
    %16 = math.sqrt %15 : vector<8x384xf32>
    %cst_7 = arith.constant 3.000000e+01 : f32
    %17 = vector.broadcast %cst_7 : f32 to vector<8x384xf32>
    %18 = arith.mulf %10, %17 : vector<8x384xf32>
    %cst_8 = arith.constant 26.3274765 : f32
    %19 = vector.broadcast %cst_8 : f32 to vector<8x384xf32>
    %20 = arith.mulf %10, %19 : vector<8x384xf32>
    %cst_9 = arith.constant 14.3827658 : f32
    %21 = vector.broadcast %cst_9 : f32 to vector<8x384xf32>
    %22 = arith.mulf %16, %21 : vector<8x384xf32>
    %23 = arith.subf %20, %22 : vector<8x384xf32>
    %cst_10 = arith.constant -0.87758255 : f32
    %24 = vector.broadcast %cst_10 : f32 to vector<8x384xf32>
    %25 = arith.cmpf ogt, %10, %24 : vector<8x384xf32>
    %cst_11 = arith.constant 7.19138288 : f32
    %26 = vector.broadcast %cst_11 : f32 to vector<8x384xf32>
    %27 = arith.subf %18, %26 : vector<8x384xf32>
    %28 = arith.select %25, %23, %27 : vector<8x384xi1>, vector<8x384xf32>
    %c384_i32 = arith.constant 384 : i32
    %29 = arith.muli %arg0, %c384_i32 : i32
    %30 = tpu.iota {dimensions = array<i32: 1>} : vector<8x384xi32>
    %c0_12 = arith.constant 0 : index
    %c0_13 = arith.constant 0 : index
    %31 = vector.load %arg4[%c0_12, %c0_13] : memref<8x1xi32, #tpu.memory_space<vmem>>, vector<8x1xi32>
    %32 = vector.broadcast %29 : i32 to vector<8x1xi32>
    %33 = arith.subi %31, %32 : vector<8x1xi32>
    %34 = vector.broadcast %33 : vector<8x1xi32> to vector<8x384xi32>
    %35 = arith.cmpi eq, %30, %34 : vector<8x384xi32>
    %36 = arith.select %35, %28, %18 : vector<8x384xi1>, vector<8x384xf32>
    %c0_14 = arith.constant 0 : index
    %c0_15 = arith.constant 0 : index
    %37 = vector.load %arg5[%c0_14, %c0_15] : memref<8x384xf32, #tpu.memory_space<vmem>>, vector<8x384xf32>
    tpu.vector_store %arg5[%c0_14, %c0_15], %36 {strides = array<i32>} : memref<8x384xf32, #tpu.memory_space<vmem>>, vector<8x384xf32>,
    return
  }
  func.func @transform_0(%arg0: i32, %arg1: i32) -> (i32, i32) {
    %c0_i32 = arith.constant 0 : i32
    %c0_i32_0 = arith.constant 0 : i32
    return %arg1, %c0_i32 : i32, i32
  }
  func.func @transform_1(%arg0: i32, %arg1: i32) -> (i32, i32) {
    %c0_i32 = arith.constant 0 : i32
    %c0_i32_0 = arith.constant 0 : i32
    return %arg0, %c0_i32 : i32, i32
  }
  func.func @transform_2(%arg0: i32, %arg1: i32) -> (i32, i32) {
    %c0_i32 = arith.constant 0 : i32
    %c0_i32_0 = arith.constant 0 : i32
    return %arg1, %c0_i32 : i32, i32
  }
  func.func @transform_3(%arg0: i32, %arg1: i32) -> (i32, i32) {
    %c0_i32 = arith.constant 0 : i32
    return %arg1, %arg0 : i32, i32
  }
}

</mosaic_0001>

<llo_original>
// kernel: tpu_custom_call.1
$region0: #{tpu_custom_call.1}
  #allocation0 [shape = 'u32[]', space=smem, size = 0x4, offset = 0x4, fixed_abs, tag = 'smem constant byte address 0x4 - core index']
  #allocation1 [shape = 'u32[72,128]{1,0:T(1,128)}', space=vmem, size = 0x9000, scoped, tag = 'internal scratch']
  #allocation2 [shape = 'f32[384,32]{1,0:T(8,128)}', space=vmem, size = 0x30000, scoped, tag = 'scratch operand']
  %s0 = inlined_call_operand.vmem [shape: f32[8,32], index: 0, kind: input, shape index: {}]
  %s1 = inlined_call_operand.vmem [shape: f32[384,32], index: 1, kind: input, shape index: {}]
  %s2 = inlined_call_operand.vmem [shape: s32[8,1], index: 2, kind: input, shape index: {}]
  %s3 = inlined_call_operand.hbm [shape: f32[8,384], index: 3, kind: output, shape index: {}]
  %s4 = sld [smem:[#allocation0]]
  $region22: #{tpu_custom_call.1} parent=0
    _
  %s6 = ssub.s32 1, %s4
  %s7 = scalar_select 0, %s6, %s4
  $region1: #{tpu_custom_call.1} parent=0
    #allocation3 [shape = 'u8[12288]{0}', space=vmem, size = 0x3000, scoped, tag = 'output window, operand 0, single buffered']
    #allocation4 [shape = 's32[1]{0}', space=sflag, size = 0x4, scoped, tag = 'scoped memory for tpu_custom_call.1']
    %8 = vsyncpa [#allocation4], 0
    // Predicated region
    $region2: #{tpu_custom_call.1} parent=1 // pred_check
      _
    $region3: #{tpu_custom_call.1} parent=1 // pred_check_branch
      %10 = sbr.rel (0) target = $region5
    $region4: #{tpu_custom_call.1} parent=1 // pred_region
      _
    $region5: #{tpu_custom_call.1} parent=1 // pred_fallthru
      _
    // Predicated region
    $region6: #{tpu_custom_call.1} parent=1 // pred_check
      _
    $region7: #{tpu_custom_call.1} parent=1 // pred_check_branch
      %12 = sbr.rel (0) target = $region9
    $region8: #{tpu_custom_call.1} parent=1 // pred_region
      _
    $region9: #{tpu_custom_call.1} parent=1 // pred_fallthru
      _
    // Predicated region
    $region10: #{tpu_custom_call.1} parent=1 // pred_check
      _
    $region11: #{tpu_custom_call.1} parent=1 // pred_check_branch
      %14 = sbr.rel (0) target = $region13
    $region12: #{tpu_custom_call.1} parent=1 // pred_region
      _
    $region13: #{tpu_custom_call.1} parent=1 // pred_fallthru
      _
    %v15 = vld [vmem:[%s1] sm:$0xff]
    %v16 = vld [vmem:[%s1 + $0x8] sm:$0xff]
    %v17 = vld [vmem:[%s1 + $0x10] sm:$0xff]
    %v18 = vld [vmem:[%s1 + $0x18] sm:$0xff]
    %v19 = vld [vmem:[%s1 + $0x20] sm:$0xff]
    %v20 = vld [vmem:[%s1 + $0x28] sm:$0xff]
    %v21 = vld [vmem:[%s1 + $0x30] sm:$0xff]
    %v22 = vld [vmem:[%s1 + $0x38] sm:$0xff]
    %v23 = vld [vmem:[%s1 + $0x40] sm:$0xff]
    %v24 = vld [vmem:[%s1 + $0x48] sm:$0xff]
    %v25 = vld [vmem:[%s1 + $0x50] sm:$0xff]
    %v26 = vld [vmem:[%s1 + $0x58] sm:$0xff]
    %v27 = vld [vmem:[%s1 + $0x60] sm:$0xff]
    %v28 = vld [vmem:[%s1 + $0x68] sm:$0xff]
    %v29 = vld [vmem:[%s1 + $0x70] sm:$0xff]
    %v30 = vld [vmem:[%s1 + $0x78] sm:$0xff]
    %v31 = vld [vmem:[%s1 + $0x80] sm:$0xff]
    %v32 = vld [vmem:[%s1 + $0x88] sm:$0xff]
    %v33 = vld [vmem:[%s1 + $0x90] sm:$0xff]
    %v34 = vld [vmem:[%s1 + $0x98] sm:$0xff]
    %v35 = vld [vmem:[%s1 + $0xa0] sm:$0xff]
    %v36 = vld [vmem:[%s1 + $0xa8] sm:$0xff]
    %v37 = vld [vmem:[%s1 + $0xb0] sm:$0xff]
    %v38 = vld [vmem:[%s1 + $0xb8] sm:$0xff]
    %v39 = vld [vmem:[%s1 + $0xc0] sm:$0xff]
    %v40 = vld [vmem:[%s1 + $0xc8] sm:$0xff]
    %v41 = vld [vmem:[%s1 + $0xd0] sm:$0xff]
    %v42 = vld [vmem:[%s1 + $0xd8] sm:$0xff]
    %v43 = vld [vmem:[%s1 + $0xe0] sm:$0xff]
    %v44 = vld [vmem:[%s1 + $0xe8] sm:$0xff]
    %v45 = vld [vmem:[%s1 + $0xf0] sm:$0xff]
    %v46 = vld [vmem:[%s1 + $0xf8] sm:$0xff]
    %v47 = vld [vmem:[%s1 + $0x100] sm:$0xff]
    %v48 = vld [vmem:[%s1 + $0x108] sm:$0xff]
    %v49 = vld [vmem:[%s1 + $0x110] sm:$0xff]
    %v50 = vld [vmem:[%s1 + $0x118] sm:$0xff]
    %v51 = vld [vmem:[%s1 + $0x120] sm:$0xff]
    %v52 = vld [vmem:[%s1 + $0x128] sm:$0xff]
    %v53 = vld [vmem:[%s1 + $0x130] sm:$0xff]
    %v54 = vld [vmem:[%s1 + $0x138] sm:$0xff]
    %v55 = vld [vmem:[%s1 + $0x140] sm:$0xff]
    %v56 = vld [vmem:[%s1 + $0x148] sm:$0xff]
    %v57 = vld [vmem:[%s1 + $0x150] sm:$0xff]
    %v58 = vld [vmem:[%s1 + $0x158] sm:$0xff]
    %v59 = vld [vmem:[%s1 + $0x160] sm:$0xff]
    %v60 = vld [vmem:[%s1 + $0x168] sm:$0xff]
    %v61 = vld [vmem:[%s1 + $0x170] sm:$0xff]
    %v62 = vld [vmem:[%s1 + $0x178] sm:$0xff]
    %v63 = vmul.f32 %v15, %v15
    %v64 = vmul.f32 %v16, %v16
    %v65 = vmul.f32 %v17, %v17
    %v66 = vmul.f32 %v18, %v18
    %v67 = vmul.f32 %v19, %v19
    %v68 = vmul.f32 %v20, %v20
    %v69 = vmul.f32 %v21, %v21
    %v70 = vmul.f32 %v22, %v22
    %v71 = vmul.f32 %v23, %v23
    %v72 = vmul.f32 %v24, %v24
    %v73 = vmul.f32 %v25, %v25
    %v74 = vmul.f32 %v26, %v26
    %v75 = vmul.f32 %v27, %v27
    %v76 = vmul.f32 %v28, %v28
    %v77 = vmul.f32 %v29, %v29
    %v78 = vmul.f32 %v30, %v30
    %v79 = vmul.f32 %v31, %v31
    %v80 = vmul.f32 %v32, %v32
    %v81 = vmul.f32 %v33, %v33
    %v82 = vmul.f32 %v34, %v34
    %v83 = vmul.f32 %v35, %v35
    %v84 = vmul.f32 %v36, %v36
    %v85 = vmul.f32 %v37, %v37
    %v86 = vmul.f32 %v38, %v38
    %v87 = vmul.f32 %v39, %v39
    %v88 = vmul.f32 %v40, %v40
    %v89 = vmul.f32 %v41, %v41
    %v90 = vmul.f32 %v42, %v42
    %v91 = vmul.f32 %v43, %v43
    %v92 = vmul.f32 %v44, %v44
    %v93 = vmul.f32 %v45, %v45
    %v94 = vmul.f32 %v46, %v46
    %v95 = vmul.f32 %v47, %v47
    %v96 = vmul.f32 %v48, %v48
    %v97 = vmul.f32 %v49, %v49
    %v98 = vmul.f32 %v50, %v50
    %v99 = vmul.f32 %v51, %v51
    %v100 = vmul.f32 %v52, %v52
    %v101 = vmul.f32 %v53, %v53
    %v102 = vmul.f32 %v54, %v54
    %v103 = vmul.f32 %v55, %v55
    %v104 = vmul.f32 %v56, %v56
    %v105 = vmul.f32 %v57, %v57
    %v106 = vmul.f32 %v58, %v58
    %v107 = vmul.f32 %v59, %v59
    %v108 = vmul.f32 %v60, %v60
    %v109 = vmul.f32 %v61, %v61
    %v110 = vmul.f32 %v62, %v62
    %vm111 = vcmask 261120
    %v112 = vsel %vm111, %v63, 0.0
    %113 = vadd.xlane.f32.xlu0 %v112
    %v114 = vpop.xlane.xlu0 %113
    %v115 = vsel %vm111, %v64, 0.0
    %116 = vadd.xlane.f32.xlu0 %v115
    %v117 = vpop.xlane.xlu0 %116
    %v118 = vsel %vm111, %v65, 0.0
    %119 = vadd.xlane.f32.xlu0 %v118
    %v120 = vpop.xlane.xlu0 %119
    %v121 = vsel %vm111, %v66, 0.0
    %122 = vadd.xlane.f32.xlu0 %v121
    %v123 = vpop.xlane.xlu0 %122
    %v124 = vsel %vm111, %v67, 0.0
    %125 = vadd.xlane.f32.xlu0 %v124
    %v126 = vpop.xlane.xlu0 %125
    %v127 = vsel %vm111, %v68, 0.0
    %128 = vadd.xlane.f32.xlu0 %v127
    %v129 = vpop.xlane.xlu0 %128
    %v130 = vsel %vm111, %v69, 0.0
    %131 = vadd.xlane.f32.xlu0 %v130
    %v132 = vpop.xlane.xlu0 %131
    %v133 = vsel %vm111, %v70, 0.0
    %134 = vadd.xlane.f32.xlu0 %v133
    %v135 = vpop.xlane.xlu0 %134
    %v136 = vsel %vm111, %v71, 0.0
    %137 = vadd.xlane.f32.xlu0 %v136
    %v138 = vpop.xlane.xlu0 %137
    %v139 = vsel %vm111, %v72, 0.0
    %140 = vadd.xlane.f32.xlu0 %v139
    %v141 = vpop.xlane.xlu0 %140
    %v142 = vsel %vm111, %v73, 0.0
    %143 = vadd.xlane.f32.xlu0 %v142
    %v144 = vpop.xlane.xlu0 %143
    %v145 = vsel %vm111, %v74, 0.0
    %146 = vadd.xlane.f32.xlu0 %v145
    %v147 = vpop.xlane.xlu0 %146
    %v148 = vsel %vm111, %v75, 0.0
    %149 = vadd.xlane.f32.xlu0 %v148
    %v150 = vpop.xlane.xlu0 %149
    %v151 = vsel %vm111, %v76, 0.0
    %152 = vadd.xlane.f32.xlu0 %v151
    %v153 = vpop.xlane.xlu0 %152
    %v154 = vsel %vm111, %v77, 0.0
    %155 = vadd.xlane.f32.xlu0 %v154
    %v156 = vpop.xlane.xlu0 %155
    %v157 = vsel %vm111, %v78, 0.0
    %158 = vadd.xlane.f32.xlu0 %v157
    %v159 = vpop.xlane.xlu0 %158
    %v160 = vsel %vm111, %v79, 0.0
    %161 = vadd.xlane.f32.xlu0 %v160
    %v162 = vpop.xlane.xlu0 %161
    %v163 = vsel %vm111, %v80, 0.0
    %164 = vadd.xlane.f32.xlu0 %v163
    %v165 = vpop.xlane.xlu0 %164
    %v166 = vsel %vm111, %v81, 0.0
    %167 = vadd.xlane.f32.xlu0 %v166
    %v168 = vpop.xlane.xlu0 %167
    %v169 = vsel %vm111, %v82, 0.0
    %170 = vadd.xlane.f32.xlu0 %v169
    %v171 = vpop.xlane.xlu0 %170
    %v172 = vsel %vm111, %v83, 0.0
    %173 = vadd.xlane.f32.xlu0 %v172
    %v174 = vpop.xlane.xlu0 %173
    %v175 = vsel %vm111, %v84, 0.0
    %176 = vadd.xlane.f32.xlu0 %v175
    %v177 = vpop.xlane.xlu0 %176
    %v178 = vsel %vm111, %v85, 0.0
    %179 = vadd.xlane.f32.xlu0 %v178
    %v180 = vpop.xlane.xlu0 %179
    %v181 = vsel %vm111, %v86, 0.0
    %182 = vadd.xlane.f32.xlu0 %v181
    %v183 = vpop.xlane.xlu0 %182
    %v184 = vsel %vm111, %v87, 0.0
    %185 = vadd.xlane.f32.xlu0 %v184
    %v186 = vpop.xlane.xlu0 %185
    %v187 = vsel %vm111, %v88, 0.0
    %188 = vadd.xlane.f32.xlu0 %v187
    %v189 = vpop.xlane.xlu0 %188
    %v190 = vsel %vm111, %v89, 0.0
    %191 = vadd.xlane.f32.xlu0 %v190
    %v192 = vpop.xlane.xlu0 %191
    %v193 = vsel %vm111, %v90, 0.0
    %194 = vadd.xlane.f32.xlu0 %v193
    %v195 = vpop.xlane.xlu0 %194
    %v196 = vsel %vm111, %v91, 0.0
    %197 = vadd.xlane.f32.xlu0 %v196
    %v198 = vpop.xlane.xlu0 %197
    %v199 = vsel %vm111, %v92, 0.0
    %200 = vadd.xlane.f32.xlu0 %v199
    %v201 = vpop.xlane.xlu0 %200
    %v202 = vsel %vm111, %v93, 0.0
    %203 = vadd.xlane.f32.xlu0 %v202
    %v204 = vpop.xlane.xlu0 %203
    %v205 = vsel %vm111, %v94, 0.0
    %206 = vadd.xlane.f32.xlu0 %v205
    %v207 = vpop.xlane.xlu0 %206
    %v208 = vsel %vm111, %v95, 0.0
    %209 = vadd.xlane.f32.xlu0 %v208
    %v210 = vpop.xlane.xlu0 %209
    %v211 = vsel %vm111, %v96, 0.0
    %212 = vadd.xlane.f32.xlu0 %v211
    %v213 = vpop.xlane.xlu0 %212
    %v214 = vsel %vm111, %v97, 0.0
    %215 = vadd.xlane.f32.xlu0 %v214
    %v216 = vpop.xlane.xlu0 %215
    %v217 = vsel %vm111, %v98, 0.0
    %218 = vadd.xlane.f32.xlu0 %v217
    %v219 = vpop.xlane.xlu0 %218
    %v220 = vsel %vm111, %v99, 0.0
    %221 = vadd.xlane.f32.xlu0 %v220
    %v222 = vpop.xlane.xlu0 %221
    %v223 = vsel %vm111, %v100, 0.0
    %224 = vadd.xlane.f32.xlu0 %v223
    %v225 = vpop.xlane.xlu0 %224
    %v226 = vsel %vm111, %v101, 0.0
    %227 = vadd.xlane.f32.xlu0 %v226
    %v228 = vpop.xlane.xlu0 %227
    %v229 = vsel %vm111, %v102, 0.0
    %230 = vadd.xlane.f32.xlu0 %v229
    %v231 = vpop.xlane.xlu0 %230
    %v232 = vsel %vm111, %v103, 0.0
    %233 = vadd.xlane.f32.xlu0 %v232
    %v234 = vpop.xlane.xlu0 %233
    %v235 = vsel %vm111, %v104, 0.0
    %236 = vadd.xlane.f32.xlu0 %v235
    %v237 = vpop.xlane.xlu0 %236
    %v238 = vsel %vm111, %v105, 0.0
    %239 = vadd.xlane.f32.xlu0 %v238
    %v240 = vpop.xlane.xlu0 %239
    %v241 = vsel %vm111, %v106, 0.0
    %242 = vadd.xlane.f32.xlu0 %v241
    %v243 = vpop.xlane.xlu0 %242
    %v244 = vsel %vm111, %v107, 0.0
    %245 = vadd.xlane.f32.xlu0 %v244
    %v246 = vpop.xlane.xlu0 %245
    %v247 = vsel %vm111, %v108, 0.0
    %248 = vadd.xlane.f32.xlu0 %v247
    %v249 = vpop.xlane.xlu0 %248
    %v250 = vsel %vm111, %v109, 0.0
    %251 = vadd.xlane.f32.xlu0 %v250
    %v252 = vpop.xlane.xlu0 %251
    %v253 = vsel %vm111, %v110, 0.0
    %254 = vadd.xlane.f32.xlu0 %v253
    %v255 = vpop.xlane.xlu0 %254
    %v256 = vmax.f32 %v114, 1e-24
    %v257 = vmax.f32 %v117, 1e-24
    %v258 = vmax.f32 %v120, 1e-24
    %v259 = vmax.f32 %v123, 1e-24
    %v260 = vmax.f32 %v126, 1e-24
    %v261 = vmax.f32 %v129, 1e-24
    %v262 = vmax.f32 %v132, 1e-24
    %v263 = vmax.f32 %v135, 1e-24
    %v264 = vmax.f32 %v138, 1e-24
    %v265 = vmax.f32 %v141, 1e-24
    %v266 = vmax.f32 %v144, 1e-24
    %v267 = vmax.f32 %v147, 1e-24
    %v268 = vmax.f32 %v150, 1e-24
    %v269 = vmax.f32 %v153, 1e-24
    %v270 = vmax.f32 %v156, 1e-24
    %v271 = vmax.f32 %v159, 1e-24
    %v272 = vmax.f32 %v162, 1e-24
    %v273 = vmax.f32 %v165, 1e-24
    %v274 = vmax.f32 %v168, 1e-24
    %v275 = vmax.f32 %v171, 1e-24
    %v276 = vmax.f32 %v174, 1e-24
    %v277 = vmax.f32 %v177, 1e-24
    %v278 = vmax.f32 %v180, 1e-24
    %v279 = vmax.f32 %v183, 1e-24
    %v280 = vmax.f32 %v186, 1e-24
    %v281 = vmax.f32 %v189, 1e-24
    %v282 = vmax.f32 %v192, 1e-24
    %v283 = vmax.f32 %v195, 1e-24
    %v284 = vmax.f32 %v198, 1e-24
    %v285 = vmax.f32 %v201, 1e-24
    %v286 = vmax.f32 %v204, 1e-24
    %v287 = vmax.f32 %v207, 1e-24
    %v288 = vmax.f32 %v210, 1e-24
    %v289 = vmax.f32 %v213, 1e-24
    %v290 = vmax.f32 %v216, 1e-24
    %v291 = vmax.f32 %v219, 1e-24
    %v292 = vmax.f32 %v222, 1e-24
    %v293 = vmax.f32 %v225, 1e-24
    %v294 = vmax.f32 %v228, 1e-24
    %v295 = vmax.f32 %v231, 1e-24
    %v296 = vmax.f32 %v234, 1e-24
    %v297 = vmax.f32 %v237, 1e-24
    %v298 = vmax.f32 %v240, 1e-24
    %v299 = vmax.f32 %v243, 1e-24
    %v300 = vmax.f32 %v246, 1e-24
    %v301 = vmax.f32 %v249, 1e-24
    %v302 = vmax.f32 %v252, 1e-24
    %v303 = vmax.f32 %v255, 1e-24
    %v304 = vrsqrt.pop %v256
    %v305 = vmul.f32 %v304, %v256
    %v306 = vmul.f32 %v305, %v304
    %v307 = vmul.f32 0.5, %v306
    %v308 = vsub.f32 1.5, %v307
    %v309 = vmul.f32 %v304, %v308
    %vm310 = vweird.f32 %v256
    %vm311 = vweird.f32 %v304
    %vm312 = vmor %vm310, %vm311
    %v313 = vsel %vm312, %v304, %v309
    %v314 = vrsqrt.pop %v257
    %v315 = vmul.f32 %v314, %v257
    %v316 = vmul.f32 %v315, %v314
    %v317 = vmul.f32 0.5, %v316
    %v318 = vsub.f32 1.5, %v317
    %v319 = vmul.f32 %v314, %v318
    %vm320 = vweird.f32 %v257
    %vm321 = vweird.f32 %v314
    %vm322 = vmor %vm320, %vm321
    %v323 = vsel %vm322, %v314, %v319
    %v324 = vrsqrt.pop %v258
    %v325 = vmul.f32 %v324, %v258
    %v326 = vmul.f32 %v325, %v324
    %v327 = vmul.f32 0.5, %v326
    %v328 = vsub.f32 1.5, %v327
    %v329 = vmul.f32 %v324, %v328
    %vm330 = vweird.f32 %v258
    %vm331 = vweird.f32 %v324
    %vm332 = vmor %vm330, %vm331
    %v333 = vsel %vm332, %v324, %v329
    %v334 = vrsqrt.pop %v259
    %v335 = vmul.f32 %v334, %v259
    %v336 = vmul.f32 %v335, %v334
    %v337 = vmul.f32 0.5, %v336
    %v338 = vsub.f32 1.5, %v337
    %v339 = vmul.f32 %v334, %v338
    %vm340 = vweird.f32 %v259
    %vm341 = vweird.f32 %v334
    %vm342 = vmor %vm340, %vm341
    %v343 = vsel %vm342, %v334, %v339
    %v344 = vrsqrt.pop %v260
    %v345 = vmul.f32 %v344, %v260
    %v346 = vmul.f32 %v345, %v344
    %v347 = vmul.f32 0.5, %v346
    %v348 = vsub.f32 1.5, %v347
    %v349 = vmul.f32 %v344, %v348
    %vm350 = vweird.f32 %v260
    %vm351 = vweird.f32 %v344
    %vm352 = vmor %vm350, %vm351
    %v353 = vsel %vm352, %v344, %v349
    %v354 = vrsqrt.pop %v261
    %v355 = vmul.f32 %v354, %v261
    %v356 = vmul.f32 %v355, %v354
    %v357 = vmul.f32 0.5, %v356
    %v358 = vsub.f32 1.5, %v357
    %v359 = vmul.f32 %v354, %v358
    %vm360 = vweird.f32 %v261
    %vm361 = vweird.f32 %v354
    %vm362 = vmor %vm360, %vm361
    %v363 = vsel %vm362, %v354, %v359
    %v364 = vrsqrt.pop %v262
    %v365 = vmul.f32 %v364, %v262
    %v366 = vmul.f32 %v365, %v364
    %v367 = vmul.f32 0.5, %v366
    %v368 = vsub.f32 1.5, %v367
    %v369 = vmul.f32 %v364, %v368
    %vm370 = vweird.f32 %v262
    %vm371 = vweird.f32 %v364
    %vm372 = vmor %vm370, %vm371
    %v373 = vsel %vm372, %v364, %v369
    %v374 = vrsqrt.pop %v263
    %v375 = vmul.f32 %v374, %v263
    %v376 = vmul.f32 %v375, %v374
    %v377 = vmul.f32 0.5, %v376
    %v378 = vsub.f32 1.5, %v377
    %v379 = vmul.f32 %v374, %v378
    %vm380 = vweird.f32 %v263
    %vm381 = vweird.f32 %v374
    %vm382 = vmor %vm380, %vm381
    %v383 = vsel %vm382, %v374, %v379
    %v384 = vrsqrt.pop %v264
    %v385 = vmul.f32 %v384, %v264
    %v386 = vmul.f32 %v385, %v384
    %v387 = vmul.f32 0.5, %v386
    %v388 = vsub.f32 1.5, %v387
    %v389 = vmul.f32 %v384, %v388
    %vm390 = vweird.f32 %v264
    %vm391 = vweird.f32 %v384
    %vm392 = vmor %vm390, %vm391
    %v393 = vsel %vm392, %v384, %v389
    %v394 = vrsqrt.pop %v265
    %v395 = vmul.f32 %v394, %v265
    %v396 = vmul.f32 %v395, %v394
    %v397 = vmul.f32 0.5, %v396
    %v398 = vsub.f32 1.5, %v397
    %v399 = vmul.f32 %v394, %v398
    %vm400 = vweird.f32 %v265
    %vm401 = vweird.f32 %v394
    %vm402 = vmor %vm400, %vm401
    %v403 = vsel %vm402, %v394, %v399
    %v404 = vrsqrt.pop %v266
    %v405 = vmul.f32 %v404, %v266
    %v406 = vmul.f32 %v405, %v404
    %v407 = vmul.f32 0.5, %v406
    %v408 = vsub.f32 1.5, %v407
    %v409 = vmul.f32 %v404, %v408
    %vm410 = vweird.f32 %v266
    %vm411 = vweird.f32 %v404
    %vm412 = vmor %vm410, %vm411
    %v413 = vsel %vm412, %v404, %v409
    %v414 = vrsqrt.pop %v267
    %v415 = vmul.f32 %v414, %v267
    %v416 = vmul.f32 %v415, %v414
    %v417 = vmul.f32 0.5, %v416
    %v418 = vsub.f32 1.5, %v417
    %v419 = vmul.f32 %v414, %v418
    %vm420 = vweird.f32 %v267
    %vm421 = vweird.f32 %v414
    %vm422 = vmor %vm420, %vm421
    %v423 = vsel %vm422, %v414, %v419
    %v424 = vrsqrt.pop %v268
    %v425 = vmul.f32 %v424, %v268
    %v426 = vmul.f32 %v425, %v424
    %v427 = vmul.f32 0.5, %v426
    %v428 = vsub.f32 1.5, %v427
    %v429 = vmul.f32 %v424, %v428
    %vm430 = vweird.f32 %v268
    %vm431 = vweird.f32 %v424
    %vm432 = vmor %vm430, %vm431
    %v433 = vsel %vm432, %v424, %v429
    %v434 = vrsqrt.pop %v269
    %v435 = vmul.f32 %v434, %v269
    %v436 = vmul.f32 %v435, %v434
    %v437 = vmul.f32 0.5, %v436
    %v438 = vsub.f32 1.5, %v437
    %v439 = vmul.f32 %v434, %v438
    %vm440 = vweird.f32 %v269
    %vm441 = vweird.f32 %v434
    %vm442 = vmor %vm440, %vm441
    %v443 = vsel %vm442, %v434, %v439
    %v444 = vrsqrt.pop %v270
    %v445 = vmul.f32 %v444, %v270
    %v446 = vmul.f32 %v445, %v444
    %v447 = vmul.f32 0.5, %v446
    %v448 = vsub.f32 1.5, %v447
    %v449 = vmul.f32 %v444, %v448
    %vm450 = vweird.f32 %v270
    %vm451 = vweird.f32 %v444
    %vm452 = vmor %vm450, %vm451
    %v453 = vsel %vm452, %v444, %v449
    %v454 = vrsqrt.pop %v271
    %v455 = vmul.f32 %v454, %v271
    %v456 = vmul.f32 %v455, %v454
    %v457 = vmul.f32 0.5, %v456
    %v458 = vsub.f32 1.5, %v457
    %v459 = vmul.f32 %v454, %v458
    %vm460 = vweird.f32 %v271
    %vm461 = vweird.f32 %v454
    %vm462 = vmor %vm460, %vm461
    %v463 = vsel %vm462, %v454, %v459
    %v464 = vrsqrt.pop %v272
    %v465 = vmul.f32 %v464, %v272
    %v466 = vmul.f32 %v465, %v464
    %v467 = vmul.f32 0.5, %v466
    %v468 = vsub.f32 1.5, %v467
    %v469 = vmul.f32 %v464, %v468
    %vm470 = vweird.f32 %v272
    %vm471 = vweird.f32 %v464
    %vm472 = vmor %vm470, %vm471
    %v473 = vsel %vm472, %v464, %v469
    %v474 = vrsqrt.pop %v273
    %v475 = vmul.f32 %v474, %v273
    %v476 = vmul.f32 %v475, %v474
    %v477 = vmul.f32 0.5, %v476
    %v478 = vsub.f32 1.5, %v477
    %v479 = vmul.f32 %v474, %v478
    %vm480 = vweird.f32 %v273
    %vm481 = vweird.f32 %v474
    %vm482 = vmor %vm480, %vm481
    %v483 = vsel %vm482, %v474, %v479
    %v484 = vrsqrt.pop %v274
    %v485 = vmul.f32 %v484, %v274
    %v486 = vmul.f32 %v485, %v484
    %v487 = vmul.f32 0.5, %v486
    %v488 = vsub.f32 1.5, %v487
    %v489 = vmul.f32 %v484, %v488
    %vm490 = vweird.f32 %v274
    %vm491 = vweird.f32 %v484
    %vm492 = vmor %vm490, %vm491
    %v493 = vsel %vm492, %v484, %v489
    %v494 = vrsqrt.pop %v275
    %v495 = vmul.f32 %v494, %v275
    %v496 = vmul.f32 %v495, %v494
    %v497 = vmul.f32 0.5, %v496
    %v498 = vsub.f32 1.5, %v497
    %v499 = vmul.f32 %v494, %v498
    %vm500 = vweird.f32 %v275
    %vm501 = vweird.f32 %v494
    %vm502 = vmor %vm500, %vm501
    %v503 = vsel %vm502, %v494, %v499
    %v504 = vrsqrt.pop %v276
    %v505 = vmul.f32 %v504, %v276
    %v506 = vmul.f32 %v505, %v504
    %v507 = vmul.f32 0.5, %v506
    %v508 = vsub.f32 1.5, %v507
    %v509 = vmul.f32 %v504, %v508
    %vm510 = vweird.f32 %v276
    %vm511 = vweird.f32 %v504
    %vm512 = vmor %vm510, %vm511
    %v513 = vsel %vm512, %v504, %v509
    %v514 = vrsqrt.pop %v277
    %v515 = vmul.f32 %v514, %v277
    %v516 = vmul.f32 %v515, %v514
    %v517 = vmul.f32 0.5, %v516
    %v518 = vsub.f32 1.5, %v517
    %v519 = vmul.f32 %v514, %v518
    %vm520 = vweird.f32 %v277
    %vm521 = vweird.f32 %v514
    %vm522 = vmor %vm520, %vm521
    %v523 = vsel %vm522, %v514, %v519
    %v524 = vrsqrt.pop %v278
    %v525 = vmul.f32 %v524, %v278
    %v526 = vmul.f32 %v525, %v524
    %v527 = vmul.f32 0.5, %v526
    %v528 = vsub.f32 1.5, %v527
    %v529 = vmul.f32 %v524, %v528
    %vm530 = vweird.f32 %v278
    %vm531 = vweird.f32 %v524
    %vm532 = vmor %vm530, %vm531
    %v533 = vsel %vm532, %v524, %v529
    %v534 = vrsqrt.pop %v279
    %v535 = vmul.f32 %v534, %v279
    %v536 = vmul.f32 %v535, %v534
    %v537 = vmul.f32 0.5, %v536
    %v538 = vsub.f32 1.5, %v537
    %v539 = vmul.f32 %v534, %v538
    %vm540 = vweird.f32 %v279
    %vm541 = vweird.f32 %v534
    %vm542 = vmor %vm540, %vm541
    %v543 = vsel %vm542, %v534, %v539
    %v544 = vrsqrt.pop %v280
    %v545 = vmul.f32 %v544, %v280
    %v546 = vmul.f32 %v545, %v544
    %v547 = vmul.f32 0.5, %v546
    %v548 = vsub.f32 1.5, %v547
    %v549 = vmul.f32 %v544, %v548
    %vm550 = vweird.f32 %v280
    %vm551 = vweird.f32 %v544
    %vm552 = vmor %vm550, %vm551
    %v553 = vsel %vm552, %v544, %v549
    %v554 = vrsqrt.pop %v281
    %v555 = vmul.f32 %v554, %v281
    %v556 = vmul.f32 %v555, %v554
    %v557 = vmul.f32 0.5, %v556
    %v558 = vsub.f32 1.5, %v557
    %v559 = vmul.f32 %v554, %v558
    %vm560 = vweird.f32 %v281
    %vm561 = vweird.f32 %v554
    %vm562 = vmor %vm560, %vm561
    %v563 = vsel %vm562, %v554, %v559
    %v564 = vrsqrt.pop %v282
    %v565 = vmul.f32 %v564, %v282
    %v566 = vmul.f32 %v565, %v564
    %v567 = vmul.f32 0.5, %v566
    %v568 = vsub.f32 1.5, %v567
    %v569 = vmul.f32 %v564, %v568
    %vm570 = vweird.f32 %v282
    %vm571 = vweird.f32 %v564
    %vm572 = vmor %vm570, %vm571
    %v573 = vsel %vm572, %v564, %v569
    %v574 = vrsqrt.pop %v283
    %v575 = vmul.f32 %v574, %v283
    %v576 = vmul.f32 %v575, %v574
    %v577 = vmul.f32 0.5, %v576
    %v578 = vsub.f32 1.5, %v577
    %v579 = vmul.f32 %v574, %v578
    %vm580 = vweird.f32 %v283
    %vm581 = vweird.f32 %v574
    %vm582 = vmor %vm580, %vm581
    %v583 = vsel %vm582, %v574, %v579
    %v584 = vrsqrt.pop %v284
    %v585 = vmul.f32 %v584, %v284
    %v586 = vmul.f32 %v585, %v584
    %v587 = vmul.f32 0.5, %v586
    %v588 = vsub.f32 1.5, %v587
    %v589 = vmul.f32 %v584, %v588
    %vm590 = vweird.f32 %v284
    %vm591 = vweird.f32 %v584
    %vm592 = vmor %vm590, %vm591
    %v593 = vsel %vm592, %v584, %v589
    %v594 = vrsqrt.pop %v285
    %v595 = vmul.f32 %v594, %v285
    %v596 = vmul.f32 %v595, %v594
    %v597 = vmul.f32 0.5, %v596
    %v598 = vsub.f32 1.5, %v597
    %v599 = vmul.f32 %v594, %v598
    %vm600 = vweird.f32 %v285
    %vm601 = vweird.f32 %v594
    %vm602 = vmor %vm600, %vm601
    %v603 = vsel %vm602, %v594, %v599
    %v604 = vrsqrt.pop %v286
    %v605 = vmul.f32 %v604, %v286
    %v606 = vmul.f32 %v605, %v604
    %v607 = vmul.f32 0.5, %v606
    %v608 = vsub.f32 1.5, %v607
    %v609 = vmul.f32 %v604, %v608
    %vm610 = vweird.f32 %v286
    %vm611 = vweird.f32 %v604
    %vm612 = vmor %vm610, %vm611
    %v613 = vsel %vm612, %v604, %v609
    %v614 = vrsqrt.pop %v287
    %v615 = vmul.f32 %v614, %v287
    %v616 = vmul.f32 %v615, %v614
    %v617 = vmul.f32 0.5, %v616
    %v618 = vsub.f32 1.5, %v617
    %v619 = vmul.f32 %v614, %v618
    %vm620 = vweird.f32 %v287
    %vm621 = vweird.f32 %v614
    %vm622 = vmor %vm620, %vm621
    %v623 = vsel %vm622, %v614, %v619
    %v624 = vrsqrt.pop %v288
    %v625 = vmul.f32 %v624, %v288
    %v626 = vmul.f32 %v625, %v624
    %v627 = vmul.f32 0.5, %v626
    %v628 = vsub.f32 1.5, %v627
    %v629 = vmul.f32 %v624, %v628
    %vm630 = vweird.f32 %v288
    %vm631 = vweird.f32 %v624
    %vm632 = vmor %vm630, %vm631
    %v633 = vsel %vm632, %v624, %v629
    %v634 = vrsqrt.pop %v289
    %v635 = vmul.f32 %v634, %v289
    %v636 = vmul.f32 %v635, %v634
    %v637 = vmul.f32 0.5, %v636
    %v638 = vsub.f32 1.5, %v637
    %v639 = vmul.f32 %v634, %v638
    %vm640 = vweird.f32 %v289
    %vm641 = vweird.f32 %v634
    %vm642 = vmor %vm640, %vm641
    %v643 = vsel %vm642, %v634, %v639
    %v644 = vrsqrt.pop %v290
    %v645 = vmul.f32 %v644, %v290
    %v646 = vmul.f32 %v645, %v644
    %v647 = vmul.f32 0.5, %v646
    %v648 = vsub.f32 1.5, %v647
    %v649 = vmul.f32 %v644, %v648
    %vm650 = vweird.f32 %v290
    %vm651 = vweird.f32 %v644
    %vm652 = vmor %vm650, %vm651
    %v653 = vsel %vm652, %v644, %v649
    %v654 = vrsqrt.pop %v291
    %v655 = vmul.f32 %v654, %v291
    %v656 = vmul.f32 %v655, %v654
    %v657 = vmul.f32 0.5, %v656
    %v658 = vsub.f32 1.5, %v657
    %v659 = vmul.f32 %v654, %v658
    %vm660 = vweird.f32 %v291
    %vm661 = vweird.f32 %v654
    %vm662 = vmor %vm660, %vm661
    %v663 = vsel %vm662, %v654, %v659
    %v664 = vrsqrt.pop %v292
    %v665 = vmul.f32 %v664, %v292
    %v666 = vmul.f32 %v665, %v664
    %v667 = vmul.f32 0.5, %v666
    %v668 = vsub.f32 1.5, %v667
    %v669 = vmul.f32 %v664, %v668
    %vm670 = vweird.f32 %v292
    %vm671 = vweird.f32 %v664
    %vm672 = vmor %vm670, %vm671
    %v673 = vsel %vm672, %v664, %v669
    %v674 = vrsqrt.pop %v293
    %v675 = vmul.f32 %v674, %v293
    %v676 = vmul.f32 %v675, %v674
    %v677 = vmul.f32 0.5, %v676
    %v678 = vsub.f32 1.5, %v677
    %v679 = vmul.f32 %v674, %v678
    %vm680 = vweird.f32 %v293
    %vm681 = vweird.f32 %v674
    %vm682 = vmor %vm680, %vm681
    %v683 = vsel %vm682, %v674, %v679
    %v684 = vrsqrt.pop %v294
    %v685 = vmul.f32 %v684, %v294
    %v686 = vmul.f32 %v685, %v684
    %v687 = vmul.f32 0.5, %v686
    %v688 = vsub.f32 1.5, %v687
    %v689 = vmul.f32 %v684, %v688
    %vm690 = vweird.f32 %v294
    %vm691 = vweird.f32 %v684
    %vm692 = vmor %vm690, %vm691
    %v693 = vsel %vm692, %v684, %v689
    %v694 = vrsqrt.pop %v295
    %v695 = vmul.f32 %v694, %v295
    %v696 = vmul.f32 %v695, %v694
    %v697 = vmul.f32 0.5, %v696
    %v698 = vsub.f32 1.5, %v697
    %v699 = vmul.f32 %v694, %v698
    %vm700 = vweird.f32 %v295
    %vm701 = vweird.f32 %v694
    %vm702 = vmor %vm700, %vm701
    %v703 = vsel %vm702, %v694, %v699
    %v704 = vrsqrt.pop %v296
    %v705 = vmul.f32 %v704, %v296
    %v706 = vmul.f32 %v705, %v704
    %v707 = vmul.f32 0.5, %v706
    %v708 = vsub.f32 1.5, %v707
    %v709 = vmul.f32 %v704, %v708
    %vm710 = vweird.f32 %v296
    %vm711 = vweird.f32 %v704
    %vm712 = vmor %vm710, %vm711
    %v713 = vsel %vm712, %v704, %v709
    %v714 = vrsqrt.pop %v297
    %v715 = vmul.f32 %v714, %v297
    %v716 = vmul.f32 %v715, %v714
    %v717 = vmul.f32 0.5, %v716
    %v718 = vsub.f32 1.5, %v717
    %v719 = vmul.f32 %v714, %v718
    %vm720 = vweird.f32 %v297
    %vm721 = vweird.f32 %v714
    %vm722 = vmor %vm720, %vm721
    %v723 = vsel %vm722, %v714, %v719
    %v724 = vrsqrt.pop %v298
    %v725 = vmul.f32 %v724, %v298
    %v726 = vmul.f32 %v725, %v724
    %v727 = vmul.f32 0.5, %v726
    %v728 = vsub.f32 1.5, %v727
    %v729 = vmul.f32 %v724, %v728
    %vm730 = vweird.f32 %v298
    %vm731 = vweird.f32 %v724
    %vm732 = vmor %vm730, %vm731
    %v733 = vsel %vm732, %v724, %v729
    %v734 = vrsqrt.pop %v299
    %v735 = vmul.f32 %v734, %v299
    %v736 = vmul.f32 %v735, %v734
    %v737 = vmul.f32 0.5, %v736
    %v738 = vsub.f32 1.5, %v737
    %v739 = vmul.f32 %v734, %v738
    %vm740 = vweird.f32 %v299
    %vm741 = vweird.f32 %v734
    %vm742 = vmor %vm740, %vm741
    %v743 = vsel %vm742, %v734, %v739
    %v744 = vrsqrt.pop %v300
    %v745 = vmul.f32 %v744, %v300
    %v746 = vmul.f32 %v745, %v744
    %v747 = vmul.f32 0.5, %v746
    %v748 = vsub.f32 1.5, %v747
    %v749 = vmul.f32 %v744, %v748
    %vm750 = vweird.f32 %v300
    %vm751 = vweird.f32 %v744
    %vm752 = vmor %vm750, %vm751
    %v753 = vsel %vm752, %v744, %v749
    %v754 = vrsqrt.pop %v301
    %v755 = vmul.f32 %v754, %v301
    %v756 = vmul.f32 %v755, %v754
    %v757 = vmul.f32 0.5, %v756
    %v758 = vsub.f32 1.5, %v757
    %v759 = vmul.f32 %v754, %v758
    %vm760 = vweird.f32 %v301
    %vm761 = vweird.f32 %v754
    %vm762 = vmor %vm760, %vm761
    %v763 = vsel %vm762, %v754, %v759
    %v764 = vrsqrt.pop %v302
    %v765 = vmul.f32 %v764, %v302
    %v766 = vmul.f32 %v765, %v764
    %v767 = vmul.f32 0.5, %v766
    %v768 = vsub.f32 1.5, %v767
    %v769 = vmul.f32 %v764, %v768
    %vm770 = vweird.f32 %v302
    %vm771 = vweird.f32 %v764
    %vm772 = vmor %vm770, %vm771
    %v773 = vsel %vm772, %v764, %v769
    %v774 = vrsqrt.pop %v303
    %v775 = vmul.f32 %v774, %v303
    %v776 = vmul.f32 %v775, %v774
    %v777 = vmul.f32 0.5, %v776
    %v778 = vsub.f32 1.5, %v777
    %v779 = vmul.f32 %v774, %v778
    %vm780 = vweird.f32 %v303
    %vm781 = vweird.f32 %v774
    %vm782 = vmor %vm780, %vm781
    %v783 = vsel %vm782, %v774, %v779
    %v784 = vmul.f32 %v15, %v313
    %v785 = vmul.f32 %v16, %v323
    %v786 = vmul.f32 %v17, %v333
    %v787 = vmul.f32 %v18, %v343
    %v788 = vmul.f32 %v19, %v353
    %v789 = vmul.f32 %v20, %v363
    %v790 = vmul.f32 %v21, %v373
    %v791 = vmul.f32 %v22, %v383
    %v792 = vmul.f32 %v23, %v393
    %v793 = vmul.f32 %v24, %v403
    %v794 = vmul.f32 %v25, %v413
    %v795 = vmul.f32 %v26, %v423
    %v796 = vmul.f32 %v27, %v433
    %v797 = vmul.f32 %v28, %v443
    %v798 = vmul.f32 %v29, %v453
    %v799 = vmul.f32 %v30, %v463
    %v800 = vmul.f32 %v31, %v473
    %v801 = vmul.f32 %v32, %v483
    %v802 = vmul.f32 %v33, %v493
    %v803 = vmul.f32 %v34, %v503
    %v804 = vmul.f32 %v35, %v513
    %v805 = vmul.f32 %v36, %v523
    %v806 = vmul.f32 %v37, %v533
    %v807 = vmul.f32 %v38, %v543
    %v808 = vmul.f32 %v39, %v553
    %v809 = vmul.f32 %v40, %v563
    %v810 = vmul.f32 %v41, %v573
    %v811 = vmul.f32 %v42, %v583
    %v812 = vmul.f32 %v43, %v593
    %v813 = vmul.f32 %v44, %v603
    %v814 = vmul.f32 %v45, %v613
    %v815 = vmul.f32 %v46, %v623
    %v816 = vmul.f32 %v47, %v633
    %v817 = vmul.f32 %v48, %v643
    %v818 = vmul.f32 %v49, %v653
    %v819 = vmul.f32 %v50, %v663
    %v820 = vmul.f32 %v51, %v673
    %v821 = vmul.f32 %v52, %v683
    %v822 = vmul.f32 %v53, %v693
    %v823 = vmul.f32 %v54, %v703
    %v824 = vmul.f32 %v55, %v713
    %v825 = vmul.f32 %v56, %v723
    %v826 = vmul.f32 %v57, %v733
    %v827 = vmul.f32 %v58, %v743
    %v828 = vmul.f32 %v59, %v753
    %v829 = vmul.f32 %v60, %v763
    %v830 = vmul.f32 %v61, %v773
    %v831 = vmul.f32 %v62, %v783
    %v832 = vld [vmem:[%s0] sm:$0xff]
    %v834 = vsel %vm111, %v832, 0
    %v837 = vsel %vm111, %v784, 0
    %v840 = vsel %vm111, %v785, 0
    %v843 = vsel %vm111, %v786, 0
    %v846 = vsel %vm111, %v787, 0
    %v849 = vsel %vm111, %v788, 0
    %v852 = vsel %vm111, %v789, 0
    %v855 = vsel %vm111, %v790, 0
    %v858 = vsel %vm111, %v791, 0
    %v861 = vsel %vm111, %v792, 0
    %v864 = vsel %vm111, %v793, 0
    %v867 = vsel %vm111, %v794, 0
    %v870 = vsel %vm111, %v795, 0
    %v873 = vsel %vm111, %v796, 0
    %v876 = vsel %vm111, %v797, 0
    %v879 = vsel %vm111, %v798, 0
    %v882 = vsel %vm111, %v799, 0
    %v885 = vsel %vm111, %v800, 0
    %v888 = vsel %vm111, %v801, 0
    %v891 = vsel %vm111, %v802, 0
    %v894 = vsel %vm111, %v803, 0
    %v897 = vsel %vm111, %v804, 0
    %v900 = vsel %vm111, %v805, 0
    %v903 = vsel %vm111, %v806, 0
    %v906 = vsel %vm111, %v807, 0
    %v909 = vsel %vm111, %v808, 0
    %v912 = vsel %vm111, %v809, 0
    %v915 = vsel %vm111, %v810, 0
    %v918 = vsel %vm111, %v811, 0
    %v921 = vsel %vm111, %v812, 0
    %v924 = vsel %vm111, %v813, 0
    %v927 = vsel %vm111, %v814, 0
    %v930 = vsel %vm111, %v815, 0
    %v933 = vsel %vm111, %v816, 0
    %v936 = vsel %vm111, %v817, 0
    %v939 = vsel %vm111, %v818, 0
    %v942 = vsel %vm111, %v819, 0
    %v945 = vsel %vm111, %v820, 0
    %v948 = vsel %vm111, %v821, 0
    %v951 = vsel %vm111, %v822, 0
    %v954 = vsel %vm111, %v823, 0
    %v957 = vsel %vm111, %v824, 0
    %v960 = vsel %vm111, %v825, 0
    %v963 = vsel %vm111, %v826, 0
    %v966 = vsel %vm111, %v827, 0
    %v969 = vsel %vm111, %v828, 0
    %v972 = vsel %vm111, %v829, 0
    %v975 = vsel %vm111, %v830, 0
    %v978 = vsel %vm111, %v831, 0
    %980 = vmatpush.xpose.msra.mxu0 %v882
    %981 = vmatpush.xpose.msra.mxu0 %v879
    %982 = vmatpush.xpose.msra.mxu0 %v876
    %983 = vmatpush.xpose.msra.mxu0 %v873
    %984 = vmatpush.xpose.msra.mxu0 %v870
    %985 = vmatpush.xpose.msra.mxu0 %v867
    %986 = vmatpush.xpose.msra.mxu0 %v864
    %987 = vmatpush.xpose.msra.mxu0 %v861
    %988 = vmatpush.xpose.msra.mxu0 %v858
    %989 = vmatpush.xpose.msra.mxu0 %v855
    %990 = vmatpush.xpose.msra.mxu0 %v852
    %991 = vmatpush.xpose.msra.mxu0 %v849
    %992 = vmatpush.xpose.msra.mxu0 %v846
    %993 = vmatpush.xpose.msra.mxu0 %v843
    %994 = vmatpush.xpose.msra.mxu0 %v840
    %995 = vmatpush.xpose.msra.mxu0 %v837
    %996 = vmatmul.f32.gmra.mxu0 %v834
    %v997 = vpop.f32.mrf.mxu0
    %v998 = vadd.f32 0.0, %v997
    %999 = vdwg.mxu0
    %1000 = vmatpush.xpose.msra.mxu0 %v930
    %1001 = vmatpush.xpose.msra.mxu0 %v927
    %1002 = vmatpush.xpose.msra.mxu0 %v924
    %1003 = vmatpush.xpose.msra.mxu0 %v921
    %1004 = vmatpush.xpose.msra.mxu0 %v918
    %1005 = vmatpush.xpose.msra.mxu0 %v915
    %1006 = vmatpush.xpose.msra.mxu0 %v912
    %1007 = vmatpush.xpose.msra.mxu0 %v909
    %1008 = vmatpush.xpose.msra.mxu0 %v906
    %1009 = vmatpush.xpose.msra.mxu0 %v903
    %1010 = vmatpush.xpose.msra.mxu0 %v900
    %1011 = vmatpush.xpose.msra.mxu0 %v897
    %1012 = vmatpush.xpose.msra.mxu0 %v894
    %1013 = vmatpush.xpose.msra.mxu0 %v891
    %1014 = vmatpush.xpose.msra.mxu0 %v888
    %1015 = vmatpush.xpose.msra.mxu0 %v885
    %1016 = vmatmul.f32.gmra.mxu0 %v834
    %v1017 = vpop.f32.mrf.mxu0
    %v1018 = vadd.f32 0.0, %v1017
    %1019 = vdwg.mxu0
    %1020 = vmatpush.xpose.msra.mxu0 %v978
    %1021 = vmatpush.xpose.msra.mxu0 %v975
    %1022 = vmatpush.xpose.msra.mxu0 %v972
    %1023 = vmatpush.xpose.msra.mxu0 %v969
    %1024 = vmatpush.xpose.msra.mxu0 %v966
    %1025 = vmatpush.xpose.msra.mxu0 %v963
    %1026 = vmatpush.xpose.msra.mxu0 %v960
    %1027 = vmatpush.xpose.msra.mxu0 %v957
    %1028 = vmatpush.xpose.msra.mxu0 %v954
    %1029 = vmatpush.xpose.msra.mxu0 %v951
    %1030 = vmatpush.xpose.msra.mxu0 %v948
    %1031 = vmatpush.xpose.msra.mxu0 %v945
    %1032 = vmatpush.xpose.msra.mxu0 %v942
    %1033 = vmatpush.xpose.msra.mxu0 %v939
    %1034 = vmatpush.xpose.msra.mxu0 %v936
    %1035 = vmatpush.xpose.msra.mxu0 %v933
    %1036 = vmatmul.f32.gmra.mxu0 %v834
    %v1037 = vpop.f32.mrf.mxu0
    %v1038 = vadd.f32 0.0, %v1037
    %1039 = vdwg.mxu0
    %v1040 = vmul.f32 %v998, %v998
    %v1041 = vmul.f32 %v1018, %v1018
    %v1042 = vmul.f32 %v1038, %v1038
    %v1043 = vsub.f32 1.0, %v1040
    %v1044 = vsub.f32 1.0, %v1041
    %v1045 = vsub.f32 1.0, %v1042
    %v1046 = vmax.f32 %v1043, 0.0
    %v1047 = vmax.f32 %v1044, 0.0
    %v1048 = vmax.f32 %v1045, 0.0
    %v1049 = vrsqrt.pop %v1046
    %v1050 = vmul.f32 %v1049, %v1046
    %v1051 = vmul.f32 %v1050, %v1049
    %v1052 = vmul.f32 0.5, %v1051
    %v1053 = vsub.f32 1.5, %v1052
    %v1054 = vmul.f32 %v1049, %v1053
    %v1055 = vmul.f32 %v1046, %v1054
    %vm1056 = vcmp.eq.f32.partialorder %v1046, inf
    %v1057 = vsel %vm1056, %v1046, %v1055
    %vm1058 = vcmp.eq.f32.partialorder %v1046, 0.0
    %v1059 = vand.u32 %v1046, 2147483648
    %v1060 = vsel %vm1058, %v1059, %v1057
    %v1061 = vrsqrt.pop %v1047
    %v1062 = vmul.f32 %v1061, %v1047
    %v1063 = vmul.f32 %v1062, %v1061
    %v1064 = vmul.f32 0.5, %v1063
    %v1065 = vsub.f32 1.5, %v1064
    %v1066 = vmul.f32 %v1061, %v1065
    %v1067 = vmul.f32 %v1047, %v1066
    %vm1068 = vcmp.eq.f32.partialorder %v1047, inf
    %v1069 = vsel %vm1068, %v1047, %v1067
    %vm1070 = vcmp.eq.f32.partialorder %v1047, 0.0
    %v1071 = vand.u32 %v1047, 2147483648
    %v1072 = vsel %vm1070, %v1071, %v1069
    %v1073 = vrsqrt.pop %v1048
    %v1074 = vmul.f32 %v1073, %v1048
    %v1075 = vmul.f32 %v1074, %v1073
    %v1076 = vmul.f32 0.5, %v1075
    %v1077 = vsub.f32 1.5, %v1076
    %v1078 = vmul.f32 %v1073, %v1077
    %v1079 = vmul.f32 %v1048, %v1078
    %vm1080 = vcmp.eq.f32.partialorder %v1048, inf
    %v1081 = vsel %vm1080, %v1048, %v1079
    %vm1082 = vcmp.eq.f32.partialorder %v1048, 0.0
    %v1083 = vand.u32 %v1048, 2147483648
    %v1084 = vsel %vm1082, %v1083, %v1081
    %v1085 = vmul.f32 %v998, 30.0
    %v1086 = vmul.f32 %v1018, 30.0
    %v1087 = vmul.f32 %v1038, 30.0
    %v1088 = vmul.f32 %v998, 26.327477
    %v1089 = vmul.f32 %v1018, 26.327477
    %v1090 = vmul.f32 %v1038, 26.327477
    %v1091 = vmul.f32 %v1060, 14.382766
    %v1092 = vmul.f32 %v1072, 14.382766
    %v1093 = vmul.f32 %v1084, 14.382766
    %v1094 = vsub.f32 %v1088, %v1091
    %v1095 = vsub.f32 %v1089, %v1092
    %v1096 = vsub.f32 %v1090, %v1093
    %vm1097 = vcmp.gt.f32.partialorder %v998, -0.87758255
    %vm1098 = vcmp.gt.f32.partialorder %v1018, -0.87758255
    %vm1099 = vcmp.gt.f32.partialorder %v1038, -0.87758255
    %v1100 = vsub.f32 %v1085, 7.191383
    %v1101 = vsub.f32 %v1086, 7.191383
    %v1102 = vsub.f32 %v1087, 7.191383
    %v1103 = vsel %vm1097, %v1094, %v1100
    %v1104 = vsel %vm1098, %v1095, %v1101
    %v1105 = vsel %vm1099, %v1096, %v1102
    %s1106 = smul.u32 0, 384
    %v1107 = vlaneseq
    %v1108 = vand.u32 %v1107, 127
    %v1109 = vadd.s32 %v1108, 128
    %v1110 = vadd.s32 %v1108, 256
    %v1111 = vld [vmem:[%s2] sm:$0xff]
    %v1112 = vstv %s1106
    %v1113 = vsub.s32 %v1111, %v1112
    %1114 = vset.pattern.permute.xlu0 0
    %1115 = vperm.xlu0 %1114, %v1113
    %v1116 = vpop.permute.xlu0 %1115
    %vm1117 = vcmp.eq.s32.totalorder %v1108, %v1116
    %vm1118 = vcmp.eq.s32.totalorder %v1109, %v1116
    %vm1119 = vcmp.eq.s32.totalorder %v1110, %v1116
    %v1120 = vsel %vm1117, %v1103, %v1085
    %v1121 = vsel %vm1118, %v1104, %v1086
    %v1122 = vsel %vm1119, %v1105, %v1087
    %1123 = vst [vmem:[#allocation3] sm:$0xff] %v1120
    %1124 = vst [vmem:[#allocation3 + $0x8] sm:$0xff] %v1121
    %1125 = vst [vmem:[#allocation3 + $0x10] sm:$0xff] %v1122
    // Predicated region
    $region14: #{tpu_custom_call.1} parent=1 // pred_check
      _
    $region15: #{tpu_custom_call.1} parent=1 // pred_check_branch
      %1127 = sbr.rel (0) target = $region17
    $region16: #{tpu_custom_call.1} parent=1 // pred_region
      %1129 = vsyncadd [#allocation4], 0
      %s1131 = sshll.u32 [#allocation3], 4
      %s1132 = int_to_ptr.vmem [resolvable:$true] %s1131
      %s1133 = sshll.u32 %s3, 4
      %s1134 = int_to_ptr.hbm [resolvable:$true] %s1133
      %1136 = dma.vmem_to_hbm [thread:$0]  %s1132, 384, %s1134, [#allocation4]
    $region17: #{tpu_custom_call.1} parent=1 // pred_fallthru
      _
    // Predicated region
    $region18: #{tpu_custom_call.1} parent=1 // pred_check
      _
    $region19: #{tpu_custom_call.1} parent=1 // pred_check_branch
      %1138 = sbr.rel (0) target = $region21
    $region20: #{tpu_custom_call.1} parent=1 // pred_region
      %1140 = dma.done [#allocation4], 384
    $region21: #{tpu_custom_call.1} parent=1 // pred_fallthru
      _
    %1141 = vsyncpa [#allocation4], 1

</llo_original>
